<compile_context>
chip_gen: v5e
topology: v5e:2x2
jax: 0.10.0
libtpu: 0.0.40
codegen_flags: <defaults>
</compile_context>

<pallas_src>
import jax
import jax.numpy as jnp
from jax.experimental import pallas as pl
from jax.experimental.pallas import tpu as pltpu

NUM_CLASSES = 5
SMOOTHING = 0.2
CONFIDENCE = 1.0 - SMOOTHING
OFF_VALUE = SMOOTHING / (NUM_CLASSES - 1)

DEFAULT_TILE_N = 256 * 1024     # samples streamed per grid step (DMA granularity)
DEFAULT_CHUNK_N = 8 * 1024      # samples per in-kernel compute chunk (bounds temporaries)
CORE_SPLITS = 2                 # leading "parallel" grid axis (v7x megacore; harmless elsewhere)


def _round_up(x, m):
    return ((x + m - 1) // m) * m


def _make_kernel(n_valid, tile_n, chunk_n):
    """Kernel with batch size / tile / chunk closed over statically."""
    num_chunks = tile_n // chunk_n

    def kernel(logits_ref, labels_ref, out_ref, acc_ref):
        ci = pl.program_id(0)                      # "parallel" core-split axis
        j = pl.program_id(1)                       # "arbitrary" reduction axis
        inner = pl.num_programs(1)

        @pl.when(j == 0)
        def _init():
            acc_ref[...] = jnp.zeros_like(acc_ref)

        # Logical tile index (duplicate tiles from the core split map past n_valid and
        # are therefore fully masked below).
        tile = ci * inner + j
        tile_start = tile * tile_n

        def chunk_body(k):
            c0 = k * chunk_n
            if num_chunks > 1:
                c0 = pl.multiple_of(c0, chunk_n)
            x = logits_ref[:, pl.ds(c0, chunk_n)].astype(jnp.float32)      # (C, chunk)
            labels = labels_ref[:, pl.ds(c0, chunk_n)].astype(jnp.int32)   # (1, chunk)

            # Closed-form Taylor numerator (n=2): fn = 1 + x + x^2/2 >= 0.5 > 0.
            fn = 1.0 + x + 0.5 * (x * x)
            s = jnp.sum(fn, axis=0, keepdims=True)                         # (1, chunk)

            # One EUP pass covers all 5 class rows at once; log(s) is the only extra log.
            log_fn = jnp.log(fn)
            log_s = jnp.log(s)

            rows = jax.lax.broadcasted_iota(jnp.int32, fn.shape, 0)
            td_logfn = jnp.where(rows == labels,
                                 jnp.float32(CONFIDENCE),
                                 jnp.float32(OFF_VALUE)) * log_fn          # (C, chunk)

            start = tile_start + c0
            full = start + chunk_n <= n_valid

            # per-sample loss = log(s) - sum_c td_c*log(fn_c); the class-sum and the
            # batch-sum are fused into two full reductions (no per-column sublane reduce).
            @pl.when(full)
            def _full():
                contrib = jnp.sum(log_s) - jnp.sum(td_logfn)
                acc_ref[...] += contrib.reshape(1, 1)

            @pl.when(jnp.logical_not(full))
            def _ragged():
                col = jax.lax.broadcasted_iota(jnp.int32, (1, chunk_n), 1) + start
                keep = col < n_valid
                contrib = (jnp.sum(jnp.where(keep, log_s, 0.0))
                           - jnp.sum(jnp.where(keep, td_logfn, 0.0)))
                acc_ref[...] += contrib.reshape(1, 1)

        if num_chunks == 1:
            chunk_body(0)
        else:
            @pl.loop(0, num_chunks)
            def _chunks(k):
                chunk_body(k)

        @pl.when(j == inner - 1)
        def _finalize():
            # One (8,128) tile per core split; every element holds this core's partial sum.
            out_ref[...] = jnp.broadcast_to(acc_ref[...], out_ref.shape)

    return kernel


def taylor_smoothed_loss_class_major(logits_cn, labels, *, tile_n=DEFAULT_TILE_N,
                                     chunk_n=DEFAULT_CHUNK_N, core_splits=CORE_SPLITS):
    """Core kernel entry: logits_cn is class-major (C, N); labels is (N,) integer."""
    c, n = logits_cn.shape
    assert c == NUM_CLASSES

    if (not jnp.issubdtype(labels.dtype, jnp.integer)) or labels.dtype.itemsize > 4:
        labels = labels.astype(jnp.int32)
    labels_row = labels.reshape(1, n)   # narrow int dtypes (int8/int16) pass through untouched

    # --- tile / chunk selection -----------------------------------------------------
    n128 = _round_up(n, 128)
    chunk_n = max(128, _round_up(min(chunk_n, n128), 128))
    tn = min(_round_up(max(tile_n, chunk_n), chunk_n), _round_up(n128, chunk_n))

    # Keep the double-buffered input windows VMEM-safe on every generation (v7x: 64 MiB).
    per_col = 2 * (NUM_CLASSES * logits_cn.dtype.itemsize + labels_row.dtype.itemsize)
    cap = max(chunk_n, ((40 << 20) // per_col) // chunk_n * chunk_n)
    tn = min(tn, cap)

    num_tiles = pl.cdiv(n, tn)
    splits = max(1, min(core_splits, num_tiles))
    inner = pl.cdiv(num_tiles, splits)
    last_tile = num_tiles - 1
    need_clamp = splits * inner > num_tiles

    def in_idx(ci, j):
        t = ci * inner + j
        if need_clamp:
            # Overflow tiles from the core split re-read the last real tile; their logical
            # column range is >= n so they are fully masked inside the kernel.
            t = jnp.minimum(t, last_tile)
        return (0, t)

    # Scoped-VMEM limit: only raised when the windows actually need it (v5e default 16 MiB).
    blocks_bytes = per_col * tn
    temps_bytes = 12 * NUM_CLASSES * chunk_n * 4
    need = blocks_bytes + temps_bytes + (2 << 20)
    vmem_limit = None if need <= (14 << 20) else int(min(max(need, 32 << 20), 48 << 20))

    out = pl.pallas_call(
        _make_kernel(n, tn, chunk_n),
        out_shape=jax.ShapeDtypeStruct((splits * 8, 128), jnp.float32),
        grid_spec=pltpu.PrefetchScalarGridSpec(
            num_scalar_prefetch=0,
            grid=(splits, inner),
            in_specs=[
                pl.BlockSpec((NUM_CLASSES, tn), in_idx),   # lane-dense (C, TN) logits window
                pl.BlockSpec((1, tn), in_idx),             # (1, TN) labels window
            ],
            out_specs=pl.BlockSpec((8, 128), lambda ci, j: (ci, 0)),  # per-core partial tile
            scratch_shapes=[pltpu.VMEM((1, 1), jnp.float32)],          # running loss sum
        ),
        compiler_params=pltpu.CompilerParams(
            dimension_semantics=("parallel", "arbitrary"),
            vmem_limit_bytes=vmem_limit),
    )(logits_cn, labels_row)

    partials = out.reshape(splits, 8, 128)[:, 0, 0]
    return jnp.sum(partials) / jnp.float32(n)


def taylor_smoothed_loss(logits, labels, **kwargs):
    """Module-compatible entry: logits (N, C) float, labels (N,) int -> scalar f32 loss."""
    n, c = logits.shape
    assert c == NUM_CLASSES
    # TODO(synk): have the upstream projection emit class-major (C, N) logits (or fuse this
    # transpose into the producer) so this extra HBM read+write of logits disappears; call
    # taylor_smoothed_loss_class_major directly when logits are already class-major.
    return taylor_smoothed_loss_class_major(jnp.transpose(logits, (1, 0)), labels, **kwargs)


def _reference_loss(logits, labels):
    """Pure-JAX reference mirroring the PyTorch module, for verification."""
    x = logits.astype(jnp.float32)
    fn = 1.0 + x + 0.5 * x * x
    p = fn / jnp.sum(fn, axis=1, keepdims=True)
    pred = jax.nn.log_softmax(jnp.log(p), axis=-1)
    true_dist = jnp.full_like(pred, OFF_VALUE)
    true_dist = true_dist.at[jnp.arange(x.shape[0]), labels].set(CONFIDENCE)
    return jnp.mean(jnp.sum(-true_dist * pred, axis=-1))


if __name__ == "__main__":
    key = jax.random.PRNGKey(0)
    k1, k2, k3, k4, k5, k6 = jax.random.split(key, 6)

    # 1) Small shape matching the module: (batch, classes) = (8, 5); single tile & chunk.
    logits = jax.random.normal(k1, (8, NUM_CLASSES), dtype=jnp.float32)
    labels = jax.random.randint(k2, (8,), 0, NUM_CLASSES, dtype=jnp.int32)
    got = jax.block_until_ready(taylor_smoothed_loss(logits, labels))
    want = jax.block_until_ready(_reference_loss(logits, labels))
    assert jnp.allclose(got, want, rtol=1e-5, atol=1e-5), (got, want)

    # 2) Exercise the 2-way "parallel" core split, the clamped duplicate tile, the
    #    serial accumulator and the ragged-column masking with tiny tiles.
    logits2 = jax.random.normal(k3, (300, NUM_CLASSES), dtype=jnp.float32)
    labels2 = jax.random.randint(k4, (300,), 0, NUM_CLASSES, dtype=jnp.int32)
    got2 = jax.block_until_ready(
        taylor_smoothed_loss(logits2, labels2, tile_n=128, chunk_n=128))
    want2 = jax.block_until_ready(_reference_loss(logits2, labels2))
    assert jnp.allclose(got2, want2, rtol=1e-5, atol=1e-5), (got2, want2)

    # 3) Exercise the multi-chunk inner loop (tile_n > chunk_n) plus raggedness.
    logits3 = jax.random.normal(k5, (1200, NUM_CLASSES), dtype=jnp.float32)
    labels3 = jax.random.randint(k6, (1200,), 0, NUM_CLASSES, dtype=jnp.int32)
    got3 = jax.block_until_ready(
        taylor_smoothed_loss(logits3, labels3, tile_n=512, chunk_n=128))
    want3 = jax.block_until_ready(_reference_loss(logits3, labels3))
    assert jnp.allclose(got3, want3, rtol=1e-5, atol=1e-5), (got3, want3)

    print("KERNEL_OK")
</pallas_src>

<mosaic_0001>
module attributes {stable_mosaic.version = 11 : i64} {
  func.func @kernel(%arg0: i32, %arg1: i32, %arg2: memref<5x128xf32, #tpu.memory_space<vmem>>, %arg3: memref<1x128xi32, #tpu.memory_space<vmem>>, %arg4: memref<8x128xf32, #tpu.memory_space<vmem>>, %arg5: memref<1x1xf32, #tpu.memory_space<vmem>>) attributes {dimension_semantics = [#tpu.dimension_semantics<parallel>, #tpu.dimension_semantics<arbitrary>], iteration_bounds = array<i64: 1, 1>, scalar_prefetch = 0 : i64, scratch_operands = 1 : i64, tpu.core_type = #tpu.core_type<tc>, window_params = [{transform_indices = @transform_0, window_bounds = array<i64: 5, 128>}, {transform_indices = @transform_1, window_bounds = array<i64: 1, 128>}, {transform_indices = @transform_2, window_bounds = array<i64: 8, 128>}]} {
    %c0_i32 = arith.constant 0 : i32
    %0 = arith.cmpi eq, %arg1, %c0_i32 : i32
    %1 = arith.extui %0 : i1 to i32
    %c0_i32_0 = arith.constant 0 : i32
    %2 = arith.cmpi ne, %1, %c0_i32_0 : i32
    scf.if %2 {
      %cst_14 = arith.constant 0.000000e+00 : f32
      %36 = vector.broadcast %cst_14 : f32 to vector<1x1xf32>
      %c0_15 = arith.constant 0 : index
      %c0_16 = arith.constant 0 : index
      %37 = vector.load %arg5[%c0_15, %c0_16] : memref<1x1xf32, #tpu.memory_space<vmem>>, vector<1x1xf32>
      tpu.vector_store %arg5[%c0_15, %c0_16], %36 {strides = array<i32>} : memref<1x1xf32, #tpu.memory_space<vmem>>, vector<1x1xf32>,
    } else {
    }
    %c1_i32 = arith.constant 1 : i32
    %3 = arith.muli %arg0, %c1_i32 : i32
    %4 = arith.addi %3, %arg1 : i32
    %c128_i32 = arith.constant 128 : i32
    %5 = arith.muli %4, %c128_i32 : i32
    %c0 = arith.constant 0 : index
    %c0_1 = arith.constant 0 : index
    %6 = vector.load %arg2[%c0, %c0_1] : memref<5x128xf32, #tpu.memory_space<vmem>>, vector<5x128xf32>
    %c0_2 = arith.constant 0 : index
    %c0_3 = arith.constant 0 : index
    %7 = vector.load %arg3[%c0_2, %c0_3] : memref<1x128xi32, #tpu.memory_space<vmem>>, vector<1x128xi32>
    %cst = arith.constant 1.000000e+00 : f32
    %8 = vector.broadcast %cst : f32 to vector<5x128xf32>
    %9 = arith.addf %8, %6 : vector<5x128xf32>
    %10 = arith.mulf %6, %6 : vector<5x128xf32>
    %cst_4 = arith.constant 5.000000e-01 : f32
    %11 = vector.broadcast %cst_4 : f32 to vector<5x128xf32>
    %12 = arith.mulf %11, %10 : vector<5x128xf32>
    %13 = arith.addf %9, %12 : vector<5x128xf32>
    %cst_5 = arith.constant dense<0.000000e+00> : vector<128xf32>
    %14 = vector.multi_reduction <add>, %13, %cst_5 [0] : vector<5x128xf32> to vector<128xf32>
    %15 = vector.shape_cast %14 : vector<128xf32> to vector<1x128xf32>
    %16 = math.log %13 : vector<5x128xf32>
    %17 = math.log %15 : vector<1x128xf32>
    %18 = tpu.iota {dimensions = array<i32: 0>} : vector<5x128xi32>
    %19 = vector.broadcast %7 : vector<1x128xi32> to vector<5x128xi32>
    %20 = arith.cmpi eq, %18, %19 : vector<5x128xi32>
    %cst_6 = arith.constant 8.000000e-01 : f32
    %cst_7 = arith.constant 5.000000e-02 : f32
    %21 = vector.broadcast %cst_6 : f32 to vector<5x128xf32>
    %22 = vector.broadcast %cst_7 : f32 to vector<5x128xf32>
    %23 = arith.select %20, %21, %22 : vector<5x128xi1>, vector<5x128xf32>
    %24 = arith.mulf %23, %16 : vector<5x128xf32>
    %c0_i32_8 = arith.constant 0 : i32
    %25 = arith.addi %5, %c0_i32_8 : i32
    %c128_i32_9 = arith.constant 128 : i32
    %26 = arith.addi %25, %c128_i32_9 : i32
    %c8_i32 = arith.constant 8 : i32
    %27 = arith.cmpi sle, %26, %c8_i32 : i32
    %28 = arith.extui %27 : i1 to i32
    %c0_i32_10 = arith.constant 0 : i32
    %29 = arith.cmpi ne, %28, %c0_i32_10 : i32
    scf.if %29 {
      %36 = vector.shape_cast %17 : vector<1x128xf32> to vector<1x1x128xf32>
      %cst_14 = arith.constant dense<0.000000e+00> : vector<1xf32>
      %37 = vector.multi_reduction <add>, %36, %cst_14 [1, 2] : vector<1x1x128xf32> to vector<1xf32>
      %38 = vector.shape_cast %37 : vector<1xf32> to vector<1x1x1xf32>
      %39 = vector.extract %38[0, 0, 0] : f32 from vector<1x1x1xf32>
      %40 = vector.shape_cast %24 : vector<5x128xf32> to vector<1x5x128xf32>
      %cst_15 = arith.constant dense<0.000000e+00> : vector<1xf32>
      %41 = vector.multi_reduction <add>, %40, %cst_15 [1, 2] : vector<1x5x128xf32> to vector<1xf32>
      %42 = vector.shape_cast %41 : vector<1xf32> to vector<1x1x1xf32>
      %43 = vector.extract %42[0, 0, 0] : f32 from vector<1x1x1xf32>
      %44 = arith.subf %39, %43 : f32
      %c0_16 = arith.constant 0 : index
      %c0_17 = arith.constant 0 : index
      %45 = vector.load %arg5[%c0_16, %c0_17] : memref<1x1xf32, #tpu.memory_space<vmem>>, vector<1x1xf32>
      %46 = vector.broadcast %44 : f32 to vector<1x1xf32>
      %47 = arith.addf %45, %46 : vector<1x1xf32>
      %c0_18 = arith.constant 0 : index
      %c0_19 = arith.constant 0 : index
      %48 = vector.load %arg5[%c0_18, %c0_19] : memref<1x1xf32, #tpu.memory_space<vmem>>, vector<1x1xf32>
      tpu.vector_store %arg5[%c0_18, %c0_19], %47 {strides = array<i32>} : memref<1x1xf32, #tpu.memory_space<vmem>>, vector<1x1xf32>,
    } else {
    }
    %true = arith.constant true
    %30 = arith.xori %27, %true : i1
    %31 = arith.extui %30 : i1 to i32
    %c0_i32_11 = arith.constant 0 : i32
    %32 = arith.cmpi ne, %31, %c0_i32_11 : i32
    scf.if %32 {
      %36 = tpu.iota {dimensions = array<i32: 1>} : vector<1x128xi32>
      %37 = vector.broadcast %25 : i32 to vector<1x128xi32>
      %38 = arith.addi %36, %37 : vector<1x128xi32>
      %c8_i32_14 = arith.constant 8 : i32
      %39 = vector.broadcast %c8_i32_14 : i32 to vector<1x128xi32>
      %40 = arith.cmpi slt, %38, %39 : vector<1x128xi32>
      %cst_15 = arith.constant 0.000000e+00 : f32
      %41 = vector.broadcast %cst_15 : f32 to vector<1x128xf32>
      %42 = arith.select %40, %17, %41 : vector<1x128xi1>, vector<1x128xf32>
      %43 = vector.shape_cast %42 : vector<1x128xf32> to vector<1x1x128xf32>
      %cst_16 = arith.constant dense<0.000000e+00> : vector<1xf32>
      %44 = vector.multi_reduction <add>, %43, %cst_16 [1, 2] : vector<1x1x128xf32> to vector<1xf32>
      %45 = vector.shape_cast %44 : vector<1xf32> to vector<1x1x1xf32>
      %46 = vector.extract %45[0, 0, 0] : f32 from vector<1x1x1xf32>
      %cst_17 = arith.constant 0.000000e+00 : f32
      %47 = vector.shape_cast %40 : vector<1x128xi1> to vector<1x128xi1>
      %48 = vector.broadcast %47 : vector<1x128xi1> to vector<5x128xi1>
      %49 = vector.broadcast %cst_17 : f32 to vector<5x128xf32>
      %50 = arith.select %48, %24, %49 : vector<5x128xi1>, vector<5x128xf32>
      %51 = vector.shape_cast %50 : vector<5x128xf32> to vector<1x5x128xf32>
      %cst_18 = arith.constant dense<0.000000e+00> : vector<1xf32>
      %52 = vector.multi_reduction <add>, %51, %cst_18 [1, 2] : vector<1x5x128xf32> to vector<1xf32>
      %53 = vector.shape_cast %52 : vector<1xf32> to vector<1x1x1xf32>
      %54 = vector.extract %53[0, 0, 0] : f32 from vector<1x1x1xf32>
      %55 = arith.subf %46, %54 : f32
      %c0_19 = arith.constant 0 : index
      %c0_20 = arith.constant 0 : index
      %56 = vector.load %arg5[%c0_19, %c0_20] : memref<1x1xf32, #tpu.memory_space<vmem>>, vector<1x1xf32>
      %57 = vector.broadcast %55 : f32 to vector<1x1xf32>
      %58 = arith.addf %56, %57 : vector<1x1xf32>
      %c0_21 = arith.constant 0 : index
      %c0_22 = arith.constant 0 : index
      %59 = vector.load %arg5[%c0_21, %c0_22] : memref<1x1xf32, #tpu.memory_space<vmem>>, vector<1x1xf32>
      tpu.vector_store %arg5[%c0_21, %c0_22], %58 {strides = array<i32>} : memref<1x1xf32, #tpu.memory_space<vmem>>, vector<1x1xf32>,
    } else {
    }
    %c0_i32_12 = arith.constant 0 : i32
    %33 = arith.cmpi eq, %arg1, %c0_i32_12 : i32
    %34 = arith.extui %33 : i1 to i32
    %c0_i32_13 = arith.constant 0 : i32
    %35 = arith.cmpi ne, %34, %c0_i32_13 : i32
    scf.if %35 {
      %c0_14 = arith.constant 0 : index
      %c0_15 = arith.constant 0 : index
      %36 = vector.load %arg5[%c0_14, %c0_15] : memref<1x1xf32, #tpu.memory_space<vmem>>, vector<1x1xf32>
      %37 = vector.shape_cast %36 : vector<1x1xf32> to vector<1x1xf32>
      %38 = vector.broadcast %37 : vector<1x1xf32> to vector<8x128xf32>
      %c0_16 = arith.constant 0 : index
      %c0_17 = arith.constant 0 : index
      %39 = vector.load %arg4[%c0_16, %c0_17] : memref<8x128xf32, #tpu.memory_space<vmem>>, vector<8x128xf32>
      tpu.vector_store %arg4[%c0_16, %c0_17], %38 {strides = array<i32>} : memref<8x128xf32, #tpu.memory_space<vmem>>, vector<8x128xf32>,
    } else {
    }
    return
  }
  func.func @transform_0(%arg0: i32, %arg1: i32) -> (i32, i32) {
    %c1_i32 = arith.constant 1 : i32
    %0 = arith.muli %arg0, %c1_i32 : i32
    %1 = arith.addi %0, %arg1 : i32
    %c0_i32 = arith.constant 0 : i32
    %c0_i32_0 = arith.constant 0 : i32
    return %c0_i32, %1 : i32, i32
  }
  func.func @transform_1(%arg0: i32, %arg1: i32) -> (i32, i32) {
    %c1_i32 = arith.constant 1 : i32
    %0 = arith.muli %arg0, %c1_i32 : i32
    %1 = arith.addi %0, %arg1 : i32
    %c0_i32 = arith.constant 0 : i32
    %c0_i32_0 = arith.constant 0 : i32
    return %c0_i32, %1 : i32, i32
  }
  func.func @transform_2(%arg0: i32, %arg1: i32) -> (i32, i32) {
    %c0_i32 = arith.constant 0 : i32
    %c0_i32_0 = arith.constant 0 : i32
    return %arg0, %c0_i32 : i32, i32
  }
}

</mosaic_0001>

<llo_original>
// kernel: tpu_custom_call.1
$region0: #{tpu_custom_call.1}
  #allocation0 [shape = 'u32[]', space=smem, size = 0x4, offset = 0x4, fixed_abs, tag = 'smem constant byte address 0x4 - core index']
  #allocation1 [shape = 'u32[72,128]{1,0:T(1,128)}', space=vmem, size = 0x9000, scoped, tag = 'internal scratch']
  #allocation2 [shape = 'f32[1,1]{1,0:T(1,128)}', space=vmem, size = 0x200, scoped, tag = 'scratch operand']
  %s0 = inlined_call_operand.hbm [shape: f32[5,8], index: 0, kind: input, shape index: {}]
  %s1 = inlined_call_operand.hbm [shape: s32[1,8], index: 1, kind: input, shape index: {}]
  %s2 = inlined_call_operand.hbm [shape: f32[8,128], index: 2, kind: output, shape index: {}]
  %s3 = sld [smem:[#allocation0]]
  $region42: #{tpu_custom_call.1} parent=0
    _
  %s5 = ssub.s32 1, %s3
  %s6 = scalar_select 0, %s5, %s3
  $region1: #{tpu_custom_call.1} parent=0
    #allocation3 [shape = 'u8[4096]{0}', space=vmem, size = 0x1000, scoped, tag = 'input window, operand 0, single buffered']
    #allocation4 [shape = 's32[1]{0}', space=sflag, size = 0x4, scoped, tag = 'scoped memory for tpu_custom_call.1']
    #allocation5 [shape = 's32[1]{0}', space=sflag, size = 0x4, scoped, tag = 'scoped memory for tpu_custom_call.1']
    #allocation6 [shape = 'u8[512]{0}', space=vmem, size = 0x400, scoped, tag = 'input window, operand 1, single buffered']
    #allocation7 [shape = 's32[1]{0}', space=sflag, size = 0x4, scoped, tag = 'scoped memory for tpu_custom_call.1']
    #allocation8 [shape = 'u8[4096]{0}', space=vmem, size = 0x1000, scoped, tag = 'output window, operand 0, single buffered']
    %7 = vsyncpa [#allocation4], 0
    %8 = vsyncpa [#allocation7], 0
    %9 = vsyncpa [#allocation5], 0
    // Predicated region
    $region2: #{tpu_custom_call.1} parent=1 // pred_check
      _
    $region3: #{tpu_custom_call.1} parent=1 // pred_check_branch
      %11 = sbr.rel (0) target = $region5
    $region4: #{tpu_custom_call.1} parent=1 // pred_region
      %s12 = sadd.s32 0, 0
      %14 = vsyncadd [#allocation4], 0
      %s15 = smul.addr %s12, 8
      %s16 = scalar_lea.hbm %s0, %s15
      %s18 = sshll.u32 %s16, 4
      %s19 = int_to_ptr.hbm [resolvable:$true] %s18
      %s20 = sshll.u32 [#allocation3], 4
      %s21 = int_to_ptr.vmem [resolvable:$true] %s20
      %23 = dma.hbm_to_vmem [thread:$0]  %s19, 128, %s21, [#allocation4]
    $region5: #{tpu_custom_call.1} parent=1 // pred_fallthru
      _
    // Predicated region
    $region6: #{tpu_custom_call.1} parent=1 // pred_check
      _
    $region7: #{tpu_custom_call.1} parent=1 // pred_check_branch
      %25 = sbr.rel (0) target = $region9
    $region8: #{tpu_custom_call.1} parent=1 // pred_region
      %s26 = sadd.s32 0, 0
      %28 = vsyncadd [#allocation7], 0
      %s29 = scalar_lea.hbm %s1, %s26
      %s31 = sshll.u32 %s29, 4
      %s32 = int_to_ptr.hbm [resolvable:$true] %s31
      %s33 = sshll.u32 [#allocation6], 4
      %s34 = int_to_ptr.vmem [resolvable:$true] %s33
      %36 = dma.hbm_to_vmem [thread:$0]  %s32, 16, %s34, [#allocation7]
    $region9: #{tpu_custom_call.1} parent=1 // pred_fallthru
      _
    // Predicated region
    $region10: #{tpu_custom_call.1} parent=1 // pred_check
      _
    $region11: #{tpu_custom_call.1} parent=1 // pred_check_branch
      %38 = sbr.rel (0) target = $region13
    $region12: #{tpu_custom_call.1} parent=1 // pred_region
      %40 = dma.done [#allocation4], 128
    $region13: #{tpu_custom_call.1} parent=1 // pred_fallthru
      _
    // Predicated region
    $region14: #{tpu_custom_call.1} parent=1 // pred_check
      _
    $region15: #{tpu_custom_call.1} parent=1 // pred_check_branch
      %42 = sbr.rel (0) target = $region17
    $region16: #{tpu_custom_call.1} parent=1 // pred_region
      %44 = dma.done [#allocation7], 16
    $region17: #{tpu_custom_call.1} parent=1 // pred_fallthru
      _
    %s45 = sadd.s32 0, 0
    %s46 = sadd.s32 0, 0
    %p47 = scmp.eq.s32.totalorder 0, 0
    // Predicated region
    $region18: #{tpu_custom_call.1} parent=1 // pred_check
      %p48 = pneg %p47
    $region19: #{tpu_custom_call.1} parent=1 // pred_check_branch
      %50 = sbr.rel (%p48) target = $region21
    $region20: #{tpu_custom_call.1} parent=1 // pred_region
      %vm51 = vcmask 0
      %52 = vst.msk [vmem:[#allocation2] sm:$0x1] %vm51, 0.0
    $region21: #{tpu_custom_call.1} parent=1 // pred_fallthru
      _
    %s53 = sadd.s32 0, 0
    %s54 = smul.u32 %s53, 128
    %v55 = vld [vmem:[#allocation3] sm:$0x1f]
    %v56 = vld [vmem:[#allocation6] sm:$0x1]
    %v57 = vadd.f32 %v55, 1.0
    %v58 = vmul.f32 %v55, %v55
    %v59 = vmul.f32 %v58, 0.5
    %v60 = vadd.f32 %v57, %v59
    %vm61 = vcmask 1044480
    %v62 = vsel %vm61, %v60, 0.0
    %v63 = vrot.slane %v62, 4
    %v64 = vadd.f32 %v62, %v63
    %v65 = vrot.slane %v64, 2
    %v66 = vadd.f32 %v64, %v65
    %v67 = vrot.slane %v66, 1
    %v68 = vadd.f32 %v66, %v67
    %v69 = vlog2.pop %v60
    %v70 = vmul.f32 %v69, 0.6931472
    %v71 = vlog2.pop %v68
    %v72 = vmul.f32 %v71, 0.6931472
    %v73 = vlaneseq
    %v74 = vshrl.u32 %v73, 7
    %v75 = vperm.slane %v56, 0
    %vm76 = vcmp.eq.s32.totalorder %v74, %v75
    %v77 = vsel %vm76, 0.8, 0.05
    %v78 = vmul.f32 %v77, %v70
    %s79 = sadd.s32 %s54, 128
    %p80 = scmp.le.s32.totalorder %s79, 8
    // Predicated region
    $region22: #{tpu_custom_call.1} parent=1 // pred_check
      %p81 = pneg %p80
    $region23: #{tpu_custom_call.1} parent=1 // pred_check_branch
      %83 = sbr.rel (%p81) target = $region25
    $region24: #{tpu_custom_call.1} parent=1 // pred_region
      %vm84 = vcmask 1040384
      %v85 = vsel %vm84, %v72, 0.0
      %86 = vadd.xlane.f32.xlu0 %v85
      %v87 = vpop.xlane.xlu0 %86
      %v88 = vrot.slane %v87, 4
      %v89 = vadd.f32 %v87, %v88
      %v90 = vrot.slane %v89, 2
      %v91 = vadd.f32 %v89, %v90
      %v92 = vrot.slane %v91, 1
      %v93 = vadd.f32 %v91, %v92
      %s94 = vtos %v93
      %v95 = vsel %vm61, %v78, 0.0
      %96 = vadd.xlane.f32.xlu0 %v95
      %v97 = vpop.xlane.xlu0 %96
      %v98 = vrot.slane %v97, 4
      %v99 = vadd.f32 %v97, %v98
      %v100 = vrot.slane %v99, 2
      %v101 = vadd.f32 %v99, %v100
      %v102 = vrot.slane %v101, 1
      %v103 = vadd.f32 %v101, %v102
      %s104 = vtos %v103
      %s105 = ssub.f32 %s94, %s104
      %v106 = vld [vmem:[#allocation2] sm:$0x1]
      %v107 = vstv %s105
      %v108 = vadd.f32 %v106, %v107
      %vm109 = vcmask 0
      %110 = vst.msk [vmem:[#allocation2] sm:$0x1] %vm109, %v108
    $region25: #{tpu_custom_call.1} parent=1 // pred_fallthru
      _
    %p111 = scmp.gt.s32.totalorder %s79, 8
    // Predicated region
    $region26: #{tpu_custom_call.1} parent=1 // pred_check
      %p112 = pneg %p111
    $region27: #{tpu_custom_call.1} parent=1 // pred_check_branch
      %114 = sbr.rel (%p112) target = $region29
    $region28: #{tpu_custom_call.1} parent=1 // pred_region
      %v115 = vlaneseq
      %v116 = vand.u32 %v115, 127
      %v117 = vstv %s54
      %v118 = vadd.s32 %v116, %v117
      %vm119 = vcmp.lt.s32.totalorder %v118, 8
      %v120 = vsel %vm119, %v72, 0.0
      %vm121 = vcmask 1040384
      %v122 = vsel %vm121, %v120, 0.0
      %123 = vadd.xlane.f32.xlu0 %v122
      %v124 = vpop.xlane.xlu0 %123
      %v125 = vrot.slane %v124, 4
      %v126 = vadd.f32 %v124, %v125
      %v127 = vrot.slane %v126, 2
      %v128 = vadd.f32 %v126, %v127
      %v129 = vrot.slane %v128, 1
      %v130 = vadd.f32 %v128, %v129
      %s131 = vtos %v130
      %v132 = vsel %vm119, 1, 0
      %vm133 = vcmp.eq.s32.totalorder %v132, 1
      %v134 = vsel %vm133, %v78, 0.0
      %v135 = vsel %vm61, %v134, 0.0
      %136 = vadd.xlane.f32.xlu0 %v135
      %v137 = vpop.xlane.xlu0 %136
      %v138 = vrot.slane %v137, 4
      %v139 = vadd.f32 %v137, %v138
      %v140 = vrot.slane %v139, 2
      %v141 = vadd.f32 %v139, %v140
      %v142 = vrot.slane %v141, 1
      %v143 = vadd.f32 %v141, %v142
      %s144 = vtos %v143
      %s145 = ssub.f32 %s131, %s144
      %v146 = vld [vmem:[#allocation2] sm:$0x1]
      %v147 = vstv %s145
      %v148 = vadd.f32 %v146, %v147
      %vm149 = vcmask 0
      %150 = vst.msk [vmem:[#allocation2] sm:$0x1] %vm149, %v148
    $region29: #{tpu_custom_call.1} parent=1 // pred_fallthru
      _
    // Predicated region
    $region30: #{tpu_custom_call.1} parent=1 // pred_check
      %p151 = pneg %p47
    $region31: #{tpu_custom_call.1} parent=1 // pred_check_branch
      %153 = sbr.rel (%p151) target = $region33
    $region32: #{tpu_custom_call.1} parent=1 // pred_region
      %v154 = vld [vmem:[#allocation2] sm:$0x1]
      %v156 = vperm.slane %v154, 0
      %157 = vset.pattern.permute.xlu0 0
      %158 = vperm.xlu0 %157, %v156
      %v159 = vpop.permute.xlu0 %158
      %161 = vst [vmem:[#allocation8] sm:$0xff] %v159
    $region33: #{tpu_custom_call.1} parent=1 // pred_fallthru
      _
    // Predicated region
    $region34: #{tpu_custom_call.1} parent=1 // pred_check
      _
    $region35: #{tpu_custom_call.1} parent=1 // pred_check_branch
      %163 = sbr.rel (0) target = $region37
    $region36: #{tpu_custom_call.1} parent=1 // pred_region
      %165 = vsyncadd [#allocation5], 0
      %s167 = sshll.u32 [#allocation8], 4
      %s168 = int_to_ptr.vmem [resolvable:$true] %s167
      %s169 = sshll.u32 %s2, 4
      %s170 = int_to_ptr.hbm [resolvable:$true] %s169
      %172 = dma.vmem_to_hbm [thread:$0]  %s168, 128, %s170, [#allocation5]
    $region37: #{tpu_custom_call.1} parent=1 // pred_fallthru
      _
    // Predicated region
    $region38: #{tpu_custom_call.1} parent=1 // pred_check
      _
    $region39: #{tpu_custom_call.1} parent=1 // pred_check_branch
      %174 = sbr.rel (0) target = $region41
    $region40: #{tpu_custom_call.1} parent=1 // pred_region
      %176 = dma.done [#allocation5], 128
    $region41: #{tpu_custom_call.1} parent=1 // pred_fallthru
      _
    %177 = vsyncpa [#allocation4], 1
    %178 = vsyncpa [#allocation7], 1
    %179 = vsyncpa [#allocation5], 1

</llo_original>
